<compile_context>
chip_gen: v7x
topology: tpu7x:2x2x1
jax: 0.10.0
libtpu: 0.0.40
codegen_flags: <defaults>
</compile_context>

<pallas_src>
import functools

import jax
import jax.numpy as jnp
from jax.experimental import pallas as pl
from jax.experimental.pallas import tpu as pltpu


def _calculate_gamma(w, block_size, p):
    # Exactly the PyTorch module's formula (uses the last spatial dim twice).
    invalid = (1.0 - p) / (block_size ** 2)
    valid = (w ** 2) / ((w - block_size + 1) ** 2)
    return invalid * valid


def _build_mask(key, n, c, h, w, block_size, gamma):
    """Bernoulli(gamma) on the (H-bs+1, W-bs+1) interior, zero-padded to (H, W).
    Equivalent to torch.bernoulli(...) followed by F.pad(mask, [bs//2]*4).
    Returned in the lane-dense (H, W, N*C) layout, float32."""
    pad = block_size // 2
    interior = jax.random.bernoulli(
        key, p=gamma, shape=(h - block_size + 1, w - block_size + 1, n * c))
    return jnp.pad(interior.astype(jnp.float32), ((pad, pad), (pad, pad), (0, 0)))


def _separable_maxpool_same(m, block_size):
    """'same' max-pool (bs x bs window, stride 1, zero padding) over the first
    two axes of a non-negative (H, W, C) array, computed separably.
    Zero padding == max_pool2d's -inf padding here because all values are >= 0
    and every window contains at least one in-range element."""
    pad = block_size // 2
    h, w, c = m.shape
    # Pool along H (leading axis: shifted slices are just address offsets).
    zh = jnp.zeros((pad, w, c), m.dtype)
    mh = jnp.concatenate([zh, m, zh], axis=0)            # (H + 2p, W, C)
    ph = mh[0:h]
    for d in range(1, block_size):
        ph = jnp.maximum(ph, mh[d:d + h])
    # Pool along W (sublane axis).
    zw = jnp.zeros((h, pad, c), m.dtype)
    mw = jnp.concatenate([zw, ph, zw], axis=1)           # (H, W + 2p, C)
    pw = mw[:, 0:w, :]
    for e in range(1, block_size):
        pw = jnp.maximum(pw, mw[:, e:e + w, :])
    return pw


def _dropblock_sum_kernel(mask_ref, psum_ref, *, block_size):
    # Pass 1: per-(channel-tile) sums of the keep mask for the normalization.
    keep = 1.0 - _separable_maxpool_same(mask_ref[...], block_size)
    s = jnp.sum(keep, axis=1, keepdims=True)             # (H, 1, tc)
    psum_ref[...] = jnp.sum(s, axis=0, keepdims=True)    # (1, 1, tc)


def _dropblock_apply_kernel(scale_ref, mask_ref, x_ref, o_ref, *, block_size):
    # Pass 2: out = keep * x * scale  (keep recomputed — cheaper than an HBM
    # round-trip of the full keep mask).
    keep = 1.0 - _separable_maxpool_same(mask_ref[...], block_size)
    o_ref[...] = (keep * x_ref[...] * scale_ref[0]).astype(o_ref.dtype)


def _pick_nc_tile(nc, h, w, vmem_budget_bytes=24 * 1024 * 1024):
    """Largest multiple-of-128 divisor of nc whose working set (~10 live f32
    tile-sized buffers: double-buffered mask/x/out + pooling temporaries) fits
    the budget.  Falls back to the full nc, which is always a legal lane dim."""
    per_nc = 10 * h * w * 4
    cap = max(128, vmem_budget_bytes // max(per_nc, 1))
    best = None
    if nc % 128 == 0:
        t = 128
        while t <= min(nc, cap):
            if nc % t == 0:
                best = t
            t += 128
    # TODO(synk): tile H as well (with a pad-wide halo) for very large H*W, and
    # support nc that is not a multiple of 128 without falling back to full nc.
    return best if best is not None else nc


def dropblock(x, key, *, block_size=5, p=0.1, training=True):
    """DropBlock forward.  x: (N, C, H, W) float array, key: jax PRNG key."""
    if not training:
        return x
    if block_size % 2 != 1:
        raise ValueError("block_size must be odd: the reference module's "
                         "pad/pool arithmetic only lines up for odd sizes.")

    N, C, H, W = x.shape
    NC = N * C
    gamma = _calculate_gamma(W, block_size, p)

    # Random mask (zero border already applied), lane-dense layout.
    mask = _build_mask(key, N, C, H, W, block_size, gamma)     # (H, W, NC) f32
    x3 = jnp.transpose(x.reshape(NC, H, W), (1, 2, 0))         # (H, W, NC)

    tile = _pick_nc_tile(NC, H, W)
    grid = (NC // tile,)
    cparams = pltpu.CompilerParams(
        dimension_semantics=("parallel",),        # megacore-shardable on v7x
        vmem_limit_bytes=48 * 1024 * 1024,        # sized for v7x's 64 MiB VMEM
    )
    flops_per_elem = 2 * (block_size - 1) + 1

    # ---- Pass 1: per-tile keep-mask sums ------------------------------------
    psums = pl.pallas_call(
        functools.partial(_dropblock_sum_kernel, block_size=block_size),
        out_shape=jax.ShapeDtypeStruct((1, 1, NC), jnp.float32),
        grid=grid,
        in_specs=[pl.BlockSpec((H, W, tile), lambda i: (0, 0, i))],
        out_specs=pl.BlockSpec((1, 1, tile), lambda i: (0, 0, i)),
        compiler_params=cparams,
        cost_estimate=pl.CostEstimate(
            flops=flops_per_elem * NC * H * W,
            transcendentals=0,
            bytes_accessed=4 * NC * H * W + 4 * NC),
    )(mask)

    # Tiny scalar math on the host/XLA side.  The reference would produce inf
    # when the pooled mask covers everything; guard the division instead.
    total = jnp.maximum(jnp.sum(psums), jnp.float32(1.0))
    scale = (jnp.float32(NC * H * W) / total).reshape(1)       # (1,) for SMEM

    # ---- Pass 2: out = keep * x * scale -------------------------------------
    out3 = pl.pallas_call(
        functools.partial(_dropblock_apply_kernel, block_size=block_size),
        out_shape=jax.ShapeDtypeStruct((H, W, NC), x.dtype),
        grid=grid,
        in_specs=[
            pl.BlockSpec(memory_space=pltpu.MemorySpace.SMEM),    # scale scalar
            pl.BlockSpec((H, W, tile), lambda i: (0, 0, i)),      # mask
            pl.BlockSpec((H, W, tile), lambda i: (0, 0, i)),      # x
        ],
        out_specs=pl.BlockSpec((H, W, tile), lambda i: (0, 0, i)),
        compiler_params=cparams,
        cost_estimate=pl.CostEstimate(
            flops=(flops_per_elem + 2) * NC * H * W,
            transcendentals=0,
            bytes_accessed=3 * 4 * NC * H * W),
    )(scale, mask, x3)

    return jnp.transpose(out3, (2, 0, 1)).reshape(N, C, H, W)


if __name__ == "__main__":
    key = jax.random.PRNGKey(0)
    xkey, mkey = jax.random.split(key)
    N, C, H, W = 2, 4, 16, 16
    bs, p = 5, 0.1
    x = jax.random.normal(xkey, (N, C, H, W), dtype=jnp.float32)

    y = dropblock(x, mkey, block_size=bs, p=p, training=True)
    jax.block_until_ready(y)
    assert y.shape == x.shape and y.dtype == x.dtype

    # Pure-JAX reference using the same Bernoulli draw.
    gamma = _calculate_gamma(W, bs, p)
    mask = _build_mask(mkey, N, C, H, W, bs, gamma)
    keep = 1.0 - _separable_maxpool_same(mask, bs)
    scale = jnp.float32(keep.size) / jnp.maximum(jnp.sum(keep), jnp.float32(1.0))
    x3 = jnp.transpose(x.reshape(N * C, H, W), (1, 2, 0))
    y_ref = jnp.transpose(keep * x3 * scale, (2, 0, 1)).reshape(N, C, H, W)
    assert jnp.allclose(y, y_ref, rtol=1e-5, atol=1e-5), \
        float(jnp.max(jnp.abs(y - y_ref)))

    print("KERNEL_OK")
</pallas_src>

<mosaic_0001>
module attributes {stable_mosaic.version = 11 : i64} {
  func.func @_dropblock_sum_kernel(%arg0: i32, %arg1: memref<16x16x8xf32, #tpu.memory_space<vmem>>, %arg2: memref<1x1x8xf32, #tpu.memory_space<vmem>>) attributes {dimension_semantics = [#tpu.dimension_semantics<parallel>], iteration_bounds = array<i64: 1>, scalar_prefetch = 0 : i64, scratch_operands = 0 : i64, tpu.core_type = #tpu.core_type<tc>, window_params = [{transform_indices = @transform_0, window_bounds = array<i64: 16, 16, 8>}, {transform_indices = @transform_1, window_bounds = array<i64: 1, 1, 8>}]} {
    %c0 = arith.constant 0 : index
    %c0_0 = arith.constant 0 : index
    %c0_1 = arith.constant 0 : index
    %0 = vector.load %arg1[%c0, %c0_0, %c0_1] : memref<16x16x8xf32, #tpu.memory_space<vmem>>, vector<16x16x8xf32>
    %cst = arith.constant 0.000000e+00 : f32
    %1 = vector.broadcast %cst : f32 to vector<2x16x8xf32>
    %2 = tpu.concatenate %1, %0, %1 in 0 : vector<2x16x8xf32>, vector<16x16x8xf32>, vector<2x16x8xf32> -> vector<20x16x8xf32>
    %3 = vector.extract_strided_slice %2 {offsets = [0, 0, 0], sizes = [16, 16, 8], strides = [1, 1, 1]} : vector<20x16x8xf32> to vector<16x16x8xf32>
    %4 = vector.extract_strided_slice %2 {offsets = [1, 0, 0], sizes = [16, 16, 8], strides = [1, 1, 1]} : vector<20x16x8xf32> to vector<16x16x8xf32>
    %5 = arith.maximumf %3, %4 : vector<16x16x8xf32>
    %6 = vector.extract_strided_slice %2 {offsets = [2, 0, 0], sizes = [16, 16, 8], strides = [1, 1, 1]} : vector<20x16x8xf32> to vector<16x16x8xf32>
    %7 = arith.maximumf %5, %6 : vector<16x16x8xf32>
    %8 = vector.extract_strided_slice %2 {offsets = [3, 0, 0], sizes = [16, 16, 8], strides = [1, 1, 1]} : vector<20x16x8xf32> to vector<16x16x8xf32>
    %9 = arith.maximumf %7, %8 : vector<16x16x8xf32>
    %10 = vector.extract_strided_slice %2 {offsets = [4, 0, 0], sizes = [16, 16, 8], strides = [1, 1, 1]} : vector<20x16x8xf32> to vector<16x16x8xf32>
    %11 = arith.maximumf %9, %10 : vector<16x16x8xf32>
    %cst_2 = arith.constant 0.000000e+00 : f32
    %12 = vector.broadcast %cst_2 : f32 to vector<16x2x8xf32>
    %13 = tpu.concatenate %12, %11, %12 in 1 : vector<16x2x8xf32>, vector<16x16x8xf32>, vector<16x2x8xf32> -> vector<16x20x8xf32>
    %14 = vector.extract_strided_slice %13 {offsets = [0, 0, 0], sizes = [16, 16, 8], strides = [1, 1, 1]} : vector<16x20x8xf32> to vector<16x16x8xf32>
    %15 = vector.extract_strided_slice %13 {offsets = [0, 1, 0], sizes = [16, 16, 8], strides = [1, 1, 1]} : vector<16x20x8xf32> to vector<16x16x8xf32>
    %16 = arith.maximumf %14, %15 : vector<16x16x8xf32>
    %17 = vector.extract_strided_slice %13 {offsets = [0, 2, 0], sizes = [16, 16, 8], strides = [1, 1, 1]} : vector<16x20x8xf32> to vector<16x16x8xf32>
    %18 = arith.maximumf %16, %17 : vector<16x16x8xf32>
    %19 = vector.extract_strided_slice %13 {offsets = [0, 3, 0], sizes = [16, 16, 8], strides = [1, 1, 1]} : vector<16x20x8xf32> to vector<16x16x8xf32>
    %20 = arith.maximumf %18, %19 : vector<16x16x8xf32>
    %21 = vector.extract_strided_slice %13 {offsets = [0, 4, 0], sizes = [16, 16, 8], strides = [1, 1, 1]} : vector<16x20x8xf32> to vector<16x16x8xf32>
    %22 = arith.maximumf %20, %21 : vector<16x16x8xf32>
    %cst_3 = arith.constant 1.000000e+00 : f32
    %23 = vector.broadcast %cst_3 : f32 to vector<16x16x8xf32>
    %24 = arith.subf %23, %22 : vector<16x16x8xf32>
    %cst_4 = arith.constant dense<0.000000e+00> : vector<16x8xf32>
    %25 = vector.multi_reduction <add>, %24, %cst_4 [1] : vector<16x16x8xf32> to vector<16x8xf32>
    %26 = vector.shape_cast %25 : vector<16x8xf32> to vector<16x1x8xf32>
    %cst_5 = arith.constant dense<0.000000e+00> : vector<1x8xf32>
    %27 = vector.multi_reduction <add>, %26, %cst_5 [0] : vector<16x1x8xf32> to vector<1x8xf32>
    %28 = vector.shape_cast %27 : vector<1x8xf32> to vector<1x1x8xf32>
    %c0_6 = arith.constant 0 : index
    %c0_7 = arith.constant 0 : index
    %c0_8 = arith.constant 0 : index
    %29 = vector.load %arg2[%c0_6, %c0_7, %c0_8] : memref<1x1x8xf32, #tpu.memory_space<vmem>>, vector<1x1x8xf32>
    tpu.vector_store %arg2[%c0_6, %c0_7, %c0_8], %28 {strides = array<i32>} : memref<1x1x8xf32, #tpu.memory_space<vmem>>, vector<1x1x8xf32>,
    return
  }
  func.func @transform_0(%arg0: i32) -> (i32, i32, i32) {
    %c0_i32 = arith.constant 0 : i32
    %c0_i32_0 = arith.constant 0 : i32
    %c0_i32_1 = arith.constant 0 : i32
    return %c0_i32, %c0_i32_0, %arg0 : i32, i32, i32
  }
  func.func @transform_1(%arg0: i32) -> (i32, i32, i32) {
    %c0_i32 = arith.constant 0 : i32
    %c0_i32_0 = arith.constant 0 : i32
    %c0_i32_1 = arith.constant 0 : i32
    return %c0_i32, %c0_i32_0, %arg0 : i32, i32, i32
  }
}

</mosaic_0001>

<llo_original>
// kernel: tpu_custom_call.1
$region0: #{tpu_custom_call.1}
  #allocation0 [shape = 'u32[]', space=smem, size = 0x4, offset = 0x4, fixed_abs, tag = 'smem constant byte address 0x4 - core index']
  #allocation1 [shape = 'u32[144,128]{1,0:T(1,128)}', space=vmem, size = 0x12000, scoped, tag = 'internal scratch']
  %s0 = inlined_call_operand.vmem [shape: f32[16,16,8], index: 0, kind: input, shape index: {}]
  %s1 = inlined_call_operand.hbm [shape: f32[1,1,8], index: 1, kind: output, shape index: {}]
  %s2 = sld [smem:[#allocation0]]
  $region14: #{tpu_custom_call.1} parent=0
    _
  %s4 = ssub.s32 1, %s2
  %s5 = scalar_select 0, %s4, %s2
  $region1: #{tpu_custom_call.1} parent=0
    #allocation2 [shape = 'u8[512]{0}', space=vmem, size = 0x400, scoped, tag = 'output window, operand 0, single buffered']
    #allocation3 [shape = 's32[1]{0}', space=sflag, size = 0x4, scoped, tag = 'scoped memory for tpu_custom_call.1']
    %6 = vsyncpa [#allocation3], 0
    // Predicated region
    $region2: #{tpu_custom_call.1} parent=1 // pred_check
      _
    $region3: #{tpu_custom_call.1} parent=1 // pred_check_branch
      %8 = sbr.rel (0) target = $region5
    $region4: #{tpu_custom_call.1} parent=1 // pred_region
      _
    $region5: #{tpu_custom_call.1} parent=1 // pred_fallthru
      _
    %v9 = vld [vmem:[%s0] sm:$0xff]
    %v10 = vld [vmem:[%s0 + $0x8] sm:$0xff]
    %v11 = vld [vmem:[%s0 + $0x10] sm:$0xff]
    %v12 = vld [vmem:[%s0 + $0x18] sm:$0xff]
    %v13 = vld [vmem:[%s0 + $0x20] sm:$0xff]
    %v14 = vld [vmem:[%s0 + $0x28] sm:$0xff]
    %v15 = vld [vmem:[%s0 + $0x30] sm:$0xff]
    %v16 = vld [vmem:[%s0 + $0x38] sm:$0xff]
    %v17 = vld [vmem:[%s0 + $0x40] sm:$0xff]
    %v18 = vld [vmem:[%s0 + $0x48] sm:$0xff]
    %v19 = vld [vmem:[%s0 + $0x50] sm:$0xff]
    %v20 = vld [vmem:[%s0 + $0x58] sm:$0xff]
    %v21 = vld [vmem:[%s0 + $0x60] sm:$0xff]
    %v22 = vld [vmem:[%s0 + $0x68] sm:$0xff]
    %v23 = vld [vmem:[%s0 + $0x70] sm:$0xff]
    %v24 = vld [vmem:[%s0 + $0x78] sm:$0xff]
    %v25 = vld [vmem:[%s0 + $0x80] sm:$0xff]
    %v26 = vld [vmem:[%s0 + $0x88] sm:$0xff]
    %v27 = vld [vmem:[%s0 + $0x90] sm:$0xff]
    %v28 = vld [vmem:[%s0 + $0x98] sm:$0xff]
    %v29 = vld [vmem:[%s0 + $0xa0] sm:$0xff]
    %v30 = vld [vmem:[%s0 + $0xa8] sm:$0xff]
    %v31 = vld [vmem:[%s0 + $0xb0] sm:$0xff]
    %v32 = vld [vmem:[%s0 + $0xb8] sm:$0xff]
    %v33 = vld [vmem:[%s0 + $0xc0] sm:$0xff]
    %v34 = vld [vmem:[%s0 + $0xc8] sm:$0xff]
    %v35 = vld [vmem:[%s0 + $0xd0] sm:$0xff]
    %v36 = vld [vmem:[%s0 + $0xd8] sm:$0xff]
    %v37 = vld [vmem:[%s0 + $0xe0] sm:$0xff]
    %v38 = vld [vmem:[%s0 + $0xe8] sm:$0xff]
    %v39 = vld [vmem:[%s0 + $0xf0] sm:$0xff]
    %v40 = vld [vmem:[%s0 + $0xf8] sm:$0xff]
    %v41 = vmax.f32 %v9, 0.0
    %v42 = vmax.f32 %v10, 0.0
    %v43 = vmax.f32 %v9, %v11
    %v44 = vmax.f32 %v10, %v12
    %v45 = vmax.f32 %v11, %v13
    %v46 = vmax.f32 %v12, %v14
    %v47 = vmax.f32 %v13, %v15
    %v48 = vmax.f32 %v14, %v16
    %v49 = vmax.f32 %v15, %v17
    %v50 = vmax.f32 %v16, %v18
    %v51 = vmax.f32 %v17, %v19
    %v52 = vmax.f32 %v18, %v20
    %v53 = vmax.f32 %v19, %v21
    %v54 = vmax.f32 %v20, %v22
    %v55 = vmax.f32 %v21, %v23
    %v56 = vmax.f32 %v22, %v24
    %v57 = vmax.f32 %v23, %v25
    %v58 = vmax.f32 %v24, %v26
    %v59 = vmax.f32 %v25, %v27
    %v60 = vmax.f32 %v26, %v28
    %v61 = vmax.f32 %v27, %v29
    %v62 = vmax.f32 %v28, %v30
    %v63 = vmax.f32 %v29, %v31
    %v64 = vmax.f32 %v30, %v32
    %v65 = vmax.f32 %v31, %v33
    %v66 = vmax.f32 %v32, %v34
    %v67 = vmax.f32 %v33, %v35
    %v68 = vmax.f32 %v34, %v36
    %v69 = vmax.f32 %v35, %v37
    %v70 = vmax.f32 %v36, %v38
    %v71 = vmax.f32 %v41, %v11
    %v72 = vmax.f32 %v42, %v12
    %v73 = vmax.f32 %v43, %v13
    %v74 = vmax.f32 %v44, %v14
    %v75 = vmax.f32 %v45, %v15
    %v76 = vmax.f32 %v46, %v16
    %v77 = vmax.f32 %v47, %v17
    %v78 = vmax.f32 %v48, %v18
    %v79 = vmax.f32 %v49, %v19
    %v80 = vmax.f32 %v50, %v20
    %v81 = vmax.f32 %v51, %v21
    %v82 = vmax.f32 %v52, %v22
    %v83 = vmax.f32 %v53, %v23
    %v84 = vmax.f32 %v54, %v24
    %v85 = vmax.f32 %v55, %v25
    %v86 = vmax.f32 %v56, %v26
    %v87 = vmax.f32 %v57, %v27
    %v88 = vmax.f32 %v58, %v28
    %v89 = vmax.f32 %v59, %v29
    %v90 = vmax.f32 %v60, %v30
    %v91 = vmax.f32 %v61, %v31
    %v92 = vmax.f32 %v62, %v32
    %v93 = vmax.f32 %v63, %v33
    %v94 = vmax.f32 %v64, %v34
    %v95 = vmax.f32 %v65, %v35
    %v96 = vmax.f32 %v66, %v36
    %v97 = vmax.f32 %v67, %v37
    %v98 = vmax.f32 %v68, %v38
    %v99 = vmax.f32 %v69, %v39
    %v100 = vmax.f32 %v70, %v40
    %v101 = vmax.f32 %v71, %v13
    %v102 = vmax.f32 %v72, %v14
    %v103 = vmax.f32 %v73, %v15
    %v104 = vmax.f32 %v74, %v16
    %v105 = vmax.f32 %v75, %v17
    %v106 = vmax.f32 %v76, %v18
    %v107 = vmax.f32 %v77, %v19
    %v108 = vmax.f32 %v78, %v20
    %v109 = vmax.f32 %v79, %v21
    %v110 = vmax.f32 %v80, %v22
    %v111 = vmax.f32 %v81, %v23
    %v112 = vmax.f32 %v82, %v24
    %v113 = vmax.f32 %v83, %v25
    %v114 = vmax.f32 %v84, %v26
    %v115 = vmax.f32 %v85, %v27
    %v116 = vmax.f32 %v86, %v28
    %v117 = vmax.f32 %v87, %v29
    %v118 = vmax.f32 %v88, %v30
    %v119 = vmax.f32 %v89, %v31
    %v120 = vmax.f32 %v90, %v32
    %v121 = vmax.f32 %v91, %v33
    %v122 = vmax.f32 %v92, %v34
    %v123 = vmax.f32 %v93, %v35
    %v124 = vmax.f32 %v94, %v36
    %v125 = vmax.f32 %v95, %v37
    %v126 = vmax.f32 %v96, %v38
    %v127 = vmax.f32 %v97, %v39
    %v128 = vmax.f32 %v98, %v40
    %v129 = vmax.f32 %v99, 0.0
    %v130 = vmax.f32 %v100, 0.0
    %v131 = vmax.f32 %v101, %v15
    %v132 = vmax.f32 %v102, %v16
    %v133 = vmax.f32 %v103, %v17
    %v134 = vmax.f32 %v104, %v18
    %v135 = vmax.f32 %v105, %v19
    %v136 = vmax.f32 %v106, %v20
    %v137 = vmax.f32 %v107, %v21
    %v138 = vmax.f32 %v108, %v22
    %v139 = vmax.f32 %v109, %v23
    %v140 = vmax.f32 %v110, %v24
    %v141 = vmax.f32 %v111, %v25
    %v142 = vmax.f32 %v112, %v26
    %v143 = vmax.f32 %v113, %v27
    %v144 = vmax.f32 %v114, %v28
    %v145 = vmax.f32 %v115, %v29
    %v146 = vmax.f32 %v116, %v30
    %v147 = vmax.f32 %v117, %v31
    %v148 = vmax.f32 %v118, %v32
    %v149 = vmax.f32 %v119, %v33
    %v150 = vmax.f32 %v120, %v34
    %v151 = vmax.f32 %v121, %v35
    %v152 = vmax.f32 %v122, %v36
    %v153 = vmax.f32 %v123, %v37
    %v154 = vmax.f32 %v124, %v38
    %v155 = vmax.f32 %v125, %v39
    %v156 = vmax.f32 %v126, %v40
    %v157 = vmax.f32 %v127, 0.0
    %v158 = vmax.f32 %v128, 0.0
    %v159 = vmax.f32 %v129, 0.0
    %v160 = vmax.f32 %v130, 0.0
    %vm193 = vcmask 1041408
    %v194 = vrot.slane %v101, 6
    %v195 = vrot.slane %v102, 6
    %v196 = vsel %vm193, %v194, %v195
    %v197 = vrot.slane %v131, 6
    %v198 = vrot.slane %v132, 6
    %v199 = vsel %vm193, %v197, %v198
    %v200 = vrot.slane %v133, 6
    %v201 = vrot.slane %v134, 6
    %v202 = vsel %vm193, %v200, %v201
    %v203 = vrot.slane %v135, 6
    %v204 = vrot.slane %v136, 6
    %v205 = vsel %vm193, %v203, %v204
    %v206 = vrot.slane %v137, 6
    %v207 = vrot.slane %v138, 6
    %v208 = vsel %vm193, %v206, %v207
    %v209 = vrot.slane %v139, 6
    %v210 = vrot.slane %v140, 6
    %v211 = vsel %vm193, %v209, %v210
    %v212 = vrot.slane %v141, 6
    %v213 = vrot.slane %v142, 6
    %v214 = vsel %vm193, %v212, %v213
    %v215 = vrot.slane %v143, 6
    %v216 = vrot.slane %v144, 6
    %v217 = vsel %vm193, %v215, %v216
    %v218 = vrot.slane %v145, 6
    %v219 = vrot.slane %v146, 6
    %v220 = vsel %vm193, %v218, %v219
    %v221 = vrot.slane %v147, 6
    %v222 = vrot.slane %v148, 6
    %v223 = vsel %vm193, %v221, %v222
    %v224 = vrot.slane %v149, 6
    %v225 = vrot.slane %v150, 6
    %v226 = vsel %vm193, %v224, %v225
    %v227 = vrot.slane %v151, 6
    %v228 = vrot.slane %v152, 6
    %v229 = vsel %vm193, %v227, %v228
    %v230 = vrot.slane %v153, 6
    %v231 = vrot.slane %v154, 6
    %v232 = vsel %vm193, %v230, %v231
    %v233 = vrot.slane %v155, 6
    %v234 = vrot.slane %v156, 6
    %v235 = vsel %vm193, %v233, %v234
    %v236 = vrot.slane %v157, 6
    %v237 = vrot.slane %v158, 6
    %v238 = vsel %vm193, %v236, %v237
    %v239 = vrot.slane %v159, 6
    %v240 = vrot.slane %v160, 6
    %v241 = vsel %vm193, %v239, %v240
    %v290 = vsel %vm193, 0.0, %v194
    %v291 = vsel %vm193, 0.0, %v197
    %v292 = vsel %vm193, 0.0, %v200
    %v293 = vsel %vm193, 0.0, %v203
    %v294 = vsel %vm193, 0.0, %v206
    %v295 = vsel %vm193, 0.0, %v209
    %v296 = vsel %vm193, 0.0, %v212
    %v297 = vsel %vm193, 0.0, %v215
    %v298 = vsel %vm193, 0.0, %v218
    %v299 = vsel %vm193, 0.0, %v221
    %v300 = vsel %vm193, 0.0, %v224
    %v301 = vsel %vm193, 0.0, %v227
    %v302 = vsel %vm193, 0.0, %v230
    %v303 = vsel %vm193, 0.0, %v233
    %v304 = vsel %vm193, 0.0, %v236
    %v305 = vsel %vm193, 0.0, %v239
    %v306 = vsel %vm193, %v195, 0.0
    %v307 = vsel %vm193, %v198, 0.0
    %v308 = vsel %vm193, %v201, 0.0
    %v309 = vsel %vm193, %v204, 0.0
    %v310 = vsel %vm193, %v207, 0.0
    %v311 = vsel %vm193, %v210, 0.0
    %v312 = vsel %vm193, %v213, 0.0
    %v313 = vsel %vm193, %v216, 0.0
    %v314 = vsel %vm193, %v219, 0.0
    %v315 = vsel %vm193, %v222, 0.0
    %v316 = vsel %vm193, %v225, 0.0
    %v317 = vsel %vm193, %v228, 0.0
    %v318 = vsel %vm193, %v231, 0.0
    %v319 = vsel %vm193, %v234, 0.0
    %v320 = vsel %vm193, %v237, 0.0
    %v321 = vsel %vm193, %v240, 0.0
    %vm354 = vcmask 1046528
    %v355 = vrot.slane %v290, 1
    %v356 = vrot.slane %v196, 1
    %v357 = vsel %vm354, %v355, %v356
    %v358 = vrot.slane %v306, 1
    %v359 = vsel %vm354, %v356, %v358
    %v360 = vrot.slane %v291, 1
    %v361 = vrot.slane %v199, 1
    %v362 = vsel %vm354, %v360, %v361
    %v363 = vrot.slane %v307, 1
    %v364 = vsel %vm354, %v361, %v363
    %v365 = vrot.slane %v292, 1
    %v366 = vrot.slane %v202, 1
    %v367 = vsel %vm354, %v365, %v366
    %v368 = vrot.slane %v308, 1
    %v369 = vsel %vm354, %v366, %v368
    %v370 = vrot.slane %v293, 1
    %v371 = vrot.slane %v205, 1
    %v372 = vsel %vm354, %v370, %v371
    %v373 = vrot.slane %v309, 1
    %v374 = vsel %vm354, %v371, %v373
    %v375 = vrot.slane %v294, 1
    %v376 = vrot.slane %v208, 1
    %v377 = vsel %vm354, %v375, %v376
    %v378 = vrot.slane %v310, 1
    %v379 = vsel %vm354, %v376, %v378
    %v380 = vrot.slane %v295, 1
    %v381 = vrot.slane %v211, 1
    %v382 = vsel %vm354, %v380, %v381
    %v383 = vrot.slane %v311, 1
    %v384 = vsel %vm354, %v381, %v383
    %v385 = vrot.slane %v296, 1
    %v386 = vrot.slane %v214, 1
    %v387 = vsel %vm354, %v385, %v386
    %v388 = vrot.slane %v312, 1
    %v389 = vsel %vm354, %v386, %v388
    %v390 = vrot.slane %v297, 1
    %v391 = vrot.slane %v217, 1
    %v392 = vsel %vm354, %v390, %v391
    %v393 = vrot.slane %v313, 1
    %v394 = vsel %vm354, %v391, %v393
    %v395 = vrot.slane %v298, 1
    %v396 = vrot.slane %v220, 1
    %v397 = vsel %vm354, %v395, %v396
    %v398 = vrot.slane %v314, 1
    %v399 = vsel %vm354, %v396, %v398
    %v400 = vrot.slane %v299, 1
    %v401 = vrot.slane %v223, 1
    %v402 = vsel %vm354, %v400, %v401
    %v403 = vrot.slane %v315, 1
    %v404 = vsel %vm354, %v401, %v403
    %v405 = vrot.slane %v300, 1
    %v406 = vrot.slane %v226, 1
    %v407 = vsel %vm354, %v405, %v406
    %v408 = vrot.slane %v316, 1
    %v409 = vsel %vm354, %v406, %v408
    %v410 = vrot.slane %v301, 1
    %v411 = vrot.slane %v229, 1
    %v412 = vsel %vm354, %v410, %v411
    %v413 = vrot.slane %v317, 1
    %v414 = vsel %vm354, %v411, %v413
    %v415 = vrot.slane %v302, 1
    %v416 = vrot.slane %v232, 1
    %v417 = vsel %vm354, %v415, %v416
    %v418 = vrot.slane %v318, 1
    %v419 = vsel %vm354, %v416, %v418
    %v420 = vrot.slane %v303, 1
    %v421 = vrot.slane %v235, 1
    %v422 = vsel %vm354, %v420, %v421
    %v423 = vrot.slane %v319, 1
    %v424 = vsel %vm354, %v421, %v423
    %v425 = vrot.slane %v304, 1
    %v426 = vrot.slane %v238, 1
    %v427 = vsel %vm354, %v425, %v426
    %v428 = vrot.slane %v320, 1
    %v429 = vsel %vm354, %v426, %v428
    %v430 = vrot.slane %v305, 1
    %v431 = vrot.slane %v241, 1
    %v432 = vsel %vm354, %v430, %v431
    %v433 = vrot.slane %v321, 1
    %v434 = vsel %vm354, %v431, %v433
    %v467 = vmax.f32 %v290, %v357
    %v468 = vmax.f32 %v196, %v359
    %v469 = vmax.f32 %v291, %v362
    %v470 = vmax.f32 %v199, %v364
    %v471 = vmax.f32 %v292, %v367
    %v472 = vmax.f32 %v202, %v369
    %v473 = vmax.f32 %v293, %v372
    %v474 = vmax.f32 %v205, %v374
    %v475 = vmax.f32 %v294, %v377
    %v476 = vmax.f32 %v208, %v379
    %v477 = vmax.f32 %v295, %v382
    %v478 = vmax.f32 %v211, %v384
    %v479 = vmax.f32 %v296, %v387
    %v480 = vmax.f32 %v214, %v389
    %v481 = vmax.f32 %v297, %v392
    %v482 = vmax.f32 %v217, %v394
    %v483 = vmax.f32 %v298, %v397
    %v484 = vmax.f32 %v220, %v399
    %v485 = vmax.f32 %v299, %v402
    %v486 = vmax.f32 %v223, %v404
    %v487 = vmax.f32 %v300, %v407
    %v488 = vmax.f32 %v226, %v409
    %v489 = vmax.f32 %v301, %v412
    %v490 = vmax.f32 %v229, %v414
    %v491 = vmax.f32 %v302, %v417
    %v492 = vmax.f32 %v232, %v419
    %v493 = vmax.f32 %v303, %v422
    %v494 = vmax.f32 %v235, %v424
    %v495 = vmax.f32 %v304, %v427
    %v496 = vmax.f32 %v238, %v429
    %v497 = vmax.f32 %v305, %v432
    %v498 = vmax.f32 %v241, %v434
    %vm499 = vcmask 1045504
    %v500 = vrot.slane %v290, 2
    %v501 = vrot.slane %v196, 2
    %v502 = vsel %vm499, %v500, %v501
    %v503 = vrot.slane %v306, 2
    %v504 = vsel %vm499, %v501, %v503
    %v505 = vrot.slane %v291, 2
    %v506 = vrot.slane %v199, 2
    %v507 = vsel %vm499, %v505, %v506
    %v508 = vrot.slane %v307, 2
    %v509 = vsel %vm499, %v506, %v508
    %v510 = vrot.slane %v292, 2
    %v511 = vrot.slane %v202, 2
    %v512 = vsel %vm499, %v510, %v511
    %v513 = vrot.slane %v308, 2
    %v514 = vsel %vm499, %v511, %v513
    %v515 = vrot.slane %v293, 2
    %v516 = vrot.slane %v205, 2
    %v517 = vsel %vm499, %v515, %v516
    %v518 = vrot.slane %v309, 2
    %v519 = vsel %vm499, %v516, %v518
    %v520 = vrot.slane %v294, 2
    %v521 = vrot.slane %v208, 2
    %v522 = vsel %vm499, %v520, %v521
    %v523 = vrot.slane %v310, 2
    %v524 = vsel %vm499, %v521, %v523
    %v525 = vrot.slane %v295, 2
    %v526 = vrot.slane %v211, 2
    %v527 = vsel %vm499, %v525, %v526
    %v528 = vrot.slane %v311, 2
    %v529 = vsel %vm499, %v526, %v528
    %v530 = vrot.slane %v296, 2
    %v531 = vrot.slane %v214, 2
    %v532 = vsel %vm499, %v530, %v531
    %v533 = vrot.slane %v312, 2
    %v534 = vsel %vm499, %v531, %v533
    %v535 = vrot.slane %v297, 2
    %v536 = vrot.slane %v217, 2
    %v537 = vsel %vm499, %v535, %v536
    %v538 = vrot.slane %v313, 2
    %v539 = vsel %vm499, %v536, %v538
    %v540 = vrot.slane %v298, 2
    %v541 = vrot.slane %v220, 2
    %v542 = vsel %vm499, %v540, %v541
    %v543 = vrot.slane %v314, 2
    %v544 = vsel %vm499, %v541, %v543
    %v545 = vrot.slane %v299, 2
    %v546 = vrot.slane %v223, 2
    %v547 = vsel %vm499, %v545, %v546
    %v548 = vrot.slane %v315, 2
    %v549 = vsel %vm499, %v546, %v548
    %v550 = vrot.slane %v300, 2
    %v551 = vrot.slane %v226, 2
    %v552 = vsel %vm499, %v550, %v551
    %v553 = vrot.slane %v316, 2
    %v554 = vsel %vm499, %v551, %v553
    %v555 = vrot.slane %v301, 2
    %v556 = vrot.slane %v229, 2
    %v557 = vsel %vm499, %v555, %v556
    %v558 = vrot.slane %v317, 2
    %v559 = vsel %vm499, %v556, %v558
    %v560 = vrot.slane %v302, 2
    %v561 = vrot.slane %v232, 2
    %v562 = vsel %vm499, %v560, %v561
    %v563 = vrot.slane %v318, 2
    %v564 = vsel %vm499, %v561, %v563
    %v565 = vrot.slane %v303, 2
    %v566 = vrot.slane %v235, 2
    %v567 = vsel %vm499, %v565, %v566
    %v568 = vrot.slane %v319, 2
    %v569 = vsel %vm499, %v566, %v568
    %v570 = vrot.slane %v304, 2
    %v571 = vrot.slane %v238, 2
    %v572 = vsel %vm499, %v570, %v571
    %v573 = vrot.slane %v320, 2
    %v574 = vsel %vm499, %v571, %v573
    %v575 = vrot.slane %v305, 2
    %v576 = vrot.slane %v241, 2
    %v577 = vsel %vm499, %v575, %v576
    %v578 = vrot.slane %v321, 2
    %v579 = vsel %vm499, %v576, %v578
    %v612 = vmax.f32 %v467, %v502
    %v613 = vmax.f32 %v468, %v504
    %v614 = vmax.f32 %v469, %v507
    %v615 = vmax.f32 %v470, %v509
    %v616 = vmax.f32 %v471, %v512
    %v617 = vmax.f32 %v472, %v514
    %v618 = vmax.f32 %v473, %v517
    %v619 = vmax.f32 %v474, %v519
    %v620 = vmax.f32 %v475, %v522
    %v621 = vmax.f32 %v476, %v524
    %v622 = vmax.f32 %v477, %v527
    %v623 = vmax.f32 %v478, %v529
    %v624 = vmax.f32 %v479, %v532
    %v625 = vmax.f32 %v480, %v534
    %v626 = vmax.f32 %v481, %v537
    %v627 = vmax.f32 %v482, %v539
    %v628 = vmax.f32 %v483, %v542
    %v629 = vmax.f32 %v484, %v544
    %v630 = vmax.f32 %v485, %v547
    %v631 = vmax.f32 %v486, %v549
    %v632 = vmax.f32 %v487, %v552
    %v633 = vmax.f32 %v488, %v554
    %v634 = vmax.f32 %v489, %v557
    %v635 = vmax.f32 %v490, %v559
    %v636 = vmax.f32 %v491, %v562
    %v637 = vmax.f32 %v492, %v564
    %v638 = vmax.f32 %v493, %v567
    %v639 = vmax.f32 %v494, %v569
    %v640 = vmax.f32 %v495, %v572
    %v641 = vmax.f32 %v496, %v574
    %v642 = vmax.f32 %v497, %v577
    %v643 = vmax.f32 %v498, %v579
    %vm644 = vcmask 1044480
    %v645 = vrot.slane %v290, 3
    %v646 = vrot.slane %v196, 3
    %v647 = vsel %vm644, %v645, %v646
    %v648 = vrot.slane %v306, 3
    %v649 = vsel %vm644, %v646, %v648
    %v650 = vrot.slane %v291, 3
    %v651 = vrot.slane %v199, 3
    %v652 = vsel %vm644, %v650, %v651
    %v653 = vrot.slane %v307, 3
    %v654 = vsel %vm644, %v651, %v653
    %v655 = vrot.slane %v292, 3
    %v656 = vrot.slane %v202, 3
    %v657 = vsel %vm644, %v655, %v656
    %v658 = vrot.slane %v308, 3
    %v659 = vsel %vm644, %v656, %v658
    %v660 = vrot.slane %v293, 3
    %v661 = vrot.slane %v205, 3
    %v662 = vsel %vm644, %v660, %v661
    %v663 = vrot.slane %v309, 3
    %v664 = vsel %vm644, %v661, %v663
    %v665 = vrot.slane %v294, 3
    %v666 = vrot.slane %v208, 3
    %v667 = vsel %vm644, %v665, %v666
    %v668 = vrot.slane %v310, 3
    %v669 = vsel %vm644, %v666, %v668
    %v670 = vrot.slane %v295, 3
    %v671 = vrot.slane %v211, 3
    %v672 = vsel %vm644, %v670, %v671
    %v673 = vrot.slane %v311, 3
    %v674 = vsel %vm644, %v671, %v673
    %v675 = vrot.slane %v296, 3
    %v676 = vrot.slane %v214, 3
    %v677 = vsel %vm644, %v675, %v676
    %v678 = vrot.slane %v312, 3
    %v679 = vsel %vm644, %v676, %v678
    %v680 = vrot.slane %v297, 3
    %v681 = vrot.slane %v217, 3
    %v682 = vsel %vm644, %v680, %v681
    %v683 = vrot.slane %v313, 3
    %v684 = vsel %vm644, %v681, %v683
    %v685 = vrot.slane %v298, 3
    %v686 = vrot.slane %v220, 3
    %v687 = vsel %vm644, %v685, %v686
    %v688 = vrot.slane %v314, 3
    %v689 = vsel %vm644, %v686, %v688
    %v690 = vrot.slane %v299, 3
    %v691 = vrot.slane %v223, 3
    %v692 = vsel %vm644, %v690, %v691
    %v693 = vrot.slane %v315, 3
    %v694 = vsel %vm644, %v691, %v693
    %v695 = vrot.slane %v300, 3
    %v696 = vrot.slane %v226, 3
    %v697 = vsel %vm644, %v695, %v696
    %v698 = vrot.slane %v316, 3
    %v699 = vsel %vm644, %v696, %v698
    %v700 = vrot.slane %v301, 3
    %v701 = vrot.slane %v229, 3
    %v702 = vsel %vm644, %v700, %v701
    %v703 = vrot.slane %v317, 3
    %v704 = vsel %vm644, %v701, %v703
    %v705 = vrot.slane %v302, 3
    %v706 = vrot.slane %v232, 3
    %v707 = vsel %vm644, %v705, %v706
    %v708 = vrot.slane %v318, 3
    %v709 = vsel %vm644, %v706, %v708
    %v710 = vrot.slane %v303, 3
    %v711 = vrot.slane %v235, 3
    %v712 = vsel %vm644, %v710, %v711
    %v713 = vrot.slane %v319, 3
    %v714 = vsel %vm644, %v711, %v713
    %v715 = vrot.slane %v304, 3
    %v716 = vrot.slane %v238, 3
    %v717 = vsel %vm644, %v715, %v716
    %v718 = vrot.slane %v320, 3
    %v719 = vsel %vm644, %v716, %v718
    %v720 = vrot.slane %v305, 3
    %v721 = vrot.slane %v241, 3
    %v722 = vsel %vm644, %v720, %v721
    %v723 = vrot.slane %v321, 3
    %v724 = vsel %vm644, %v721, %v723
    %v757 = vmax.f32 %v612, %v647
    %v758 = vmax.f32 %v613, %v649
    %v759 = vmax.f32 %v614, %v652
    %v760 = vmax.f32 %v615, %v654
    %v761 = vmax.f32 %v616, %v657
    %v762 = vmax.f32 %v617, %v659
    %v763 = vmax.f32 %v618, %v662
    %v764 = vmax.f32 %v619, %v664
    %v765 = vmax.f32 %v620, %v667
    %v766 = vmax.f32 %v621, %v669
    %v767 = vmax.f32 %v622, %v672
    %v768 = vmax.f32 %v623, %v674
    %v769 = vmax.f32 %v624, %v677
    %v770 = vmax.f32 %v625, %v679
    %v771 = vmax.f32 %v626, %v682
    %v772 = vmax.f32 %v627, %v684
    %v773 = vmax.f32 %v628, %v687
    %v774 = vmax.f32 %v629, %v689
    %v775 = vmax.f32 %v630, %v692
    %v776 = vmax.f32 %v631, %v694
    %v777 = vmax.f32 %v632, %v697
    %v778 = vmax.f32 %v633, %v699
    %v779 = vmax.f32 %v634, %v702
    %v780 = vmax.f32 %v635, %v704
    %v781 = vmax.f32 %v636, %v707
    %v782 = vmax.f32 %v637, %v709
    %v783 = vmax.f32 %v638, %v712
    %v784 = vmax.f32 %v639, %v714
    %v785 = vmax.f32 %v640, %v717
    %v786 = vmax.f32 %v641, %v719
    %v787 = vmax.f32 %v642, %v722
    %v788 = vmax.f32 %v643, %v724
    %vm789 = vcmask 1043456
    %v790 = vrot.slane %v290, 4
    %v791 = vrot.slane %v196, 4
    %v792 = vsel %vm789, %v790, %v791
    %v793 = vrot.slane %v306, 4
    %v794 = vsel %vm789, %v791, %v793
    %v795 = vrot.slane %v291, 4
    %v796 = vrot.slane %v199, 4
    %v797 = vsel %vm789, %v795, %v796
    %v798 = vrot.slane %v307, 4
    %v799 = vsel %vm789, %v796, %v798
    %v800 = vrot.slane %v292, 4
    %v801 = vrot.slane %v202, 4
    %v802 = vsel %vm789, %v800, %v801
    %v803 = vrot.slane %v308, 4
    %v804 = vsel %vm789, %v801, %v803
    %v805 = vrot.slane %v293, 4
    %v806 = vrot.slane %v205, 4
    %v807 = vsel %vm789, %v805, %v806
    %v808 = vrot.slane %v309, 4
    %v809 = vsel %vm789, %v806, %v808
    %v810 = vrot.slane %v294, 4
    %v811 = vrot.slane %v208, 4
    %v812 = vsel %vm789, %v810, %v811
    %v813 = vrot.slane %v310, 4
    %v814 = vsel %vm789, %v811, %v813
    %v815 = vrot.slane %v295, 4
    %v816 = vrot.slane %v211, 4
    %v817 = vsel %vm789, %v815, %v816
    %v818 = vrot.slane %v311, 4
    %v819 = vsel %vm789, %v816, %v818
    %v820 = vrot.slane %v296, 4
    %v821 = vrot.slane %v214, 4
    %v822 = vsel %vm789, %v820, %v821
    %v823 = vrot.slane %v312, 4
    %v824 = vsel %vm789, %v821, %v823
    %v825 = vrot.slane %v297, 4
    %v826 = vrot.slane %v217, 4
    %v827 = vsel %vm789, %v825, %v826
    %v828 = vrot.slane %v313, 4
    %v829 = vsel %vm789, %v826, %v828
    %v830 = vrot.slane %v298, 4
    %v831 = vrot.slane %v220, 4
    %v832 = vsel %vm789, %v830, %v831
    %v833 = vrot.slane %v314, 4
    %v834 = vsel %vm789, %v831, %v833
    %v835 = vrot.slane %v299, 4
    %v836 = vrot.slane %v223, 4
    %v837 = vsel %vm789, %v835, %v836
    %v838 = vrot.slane %v315, 4
    %v839 = vsel %vm789, %v836, %v838
    %v840 = vrot.slane %v300, 4
    %v841 = vrot.slane %v226, 4
    %v842 = vsel %vm789, %v840, %v841
    %v843 = vrot.slane %v316, 4
    %v844 = vsel %vm789, %v841, %v843
    %v845 = vrot.slane %v301, 4
    %v846 = vrot.slane %v229, 4
    %v847 = vsel %vm789, %v845, %v846
    %v848 = vrot.slane %v317, 4
    %v849 = vsel %vm789, %v846, %v848
    %v850 = vrot.slane %v302, 4
    %v851 = vrot.slane %v232, 4
    %v852 = vsel %vm789, %v850, %v851
    %v853 = vrot.slane %v318, 4
    %v854 = vsel %vm789, %v851, %v853
    %v855 = vrot.slane %v303, 4
    %v856 = vrot.slane %v235, 4
    %v857 = vsel %vm789, %v855, %v856
    %v858 = vrot.slane %v319, 4
    %v859 = vsel %vm789, %v856, %v858
    %v860 = vrot.slane %v304, 4
    %v861 = vrot.slane %v238, 4
    %v862 = vsel %vm789, %v860, %v861
    %v863 = vrot.slane %v320, 4
    %v864 = vsel %vm789, %v861, %v863
    %v865 = vrot.slane %v305, 4
    %v866 = vrot.slane %v241, 4
    %v867 = vsel %vm789, %v865, %v866
    %v868 = vrot.slane %v321, 4
    %v869 = vsel %vm789, %v866, %v868
    %v902 = vmax.f32 %v757, %v792
    %v903 = vmax.f32 %v758, %v794
    %v904 = vmax.f32 %v759, %v797
    %v905 = vmax.f32 %v760, %v799
    %v906 = vmax.f32 %v761, %v802
    %v907 = vmax.f32 %v762, %v804
    %v908 = vmax.f32 %v763, %v807
    %v909 = vmax.f32 %v764, %v809
    %v910 = vmax.f32 %v765, %v812
    %v911 = vmax.f32 %v766, %v814
    %v912 = vmax.f32 %v767, %v817
    %v913 = vmax.f32 %v768, %v819
    %v914 = vmax.f32 %v769, %v822
    %v915 = vmax.f32 %v770, %v824
    %v916 = vmax.f32 %v771, %v827
    %v917 = vmax.f32 %v772, %v829
    %v918 = vmax.f32 %v773, %v832
    %v919 = vmax.f32 %v774, %v834
    %v920 = vmax.f32 %v775, %v837
    %v921 = vmax.f32 %v776, %v839
    %v922 = vmax.f32 %v777, %v842
    %v923 = vmax.f32 %v778, %v844
    %v924 = vmax.f32 %v779, %v847
    %v925 = vmax.f32 %v780, %v849
    %v926 = vmax.f32 %v781, %v852
    %v927 = vmax.f32 %v782, %v854
    %v928 = vmax.f32 %v783, %v857
    %v929 = vmax.f32 %v784, %v859
    %v930 = vmax.f32 %v785, %v862
    %v931 = vmax.f32 %v786, %v864
    %v932 = vmax.f32 %v787, %v867
    %v933 = vmax.f32 %v788, %v869
    %v934 = vsub.f32 1.0, %v902
    %v935 = vsub.f32 1.0, %v903
    %v936 = vsub.f32 1.0, %v904
    %v937 = vsub.f32 1.0, %v905
    %v938 = vsub.f32 1.0, %v906
    %v939 = vsub.f32 1.0, %v907
    %v940 = vsub.f32 1.0, %v908
    %v941 = vsub.f32 1.0, %v909
    %v942 = vsub.f32 1.0, %v910
    %v943 = vsub.f32 1.0, %v911
    %v944 = vsub.f32 1.0, %v912
    %v945 = vsub.f32 1.0, %v913
    %v946 = vsub.f32 1.0, %v914
    %v947 = vsub.f32 1.0, %v915
    %v948 = vsub.f32 1.0, %v916
    %v949 = vsub.f32 1.0, %v917
    %v950 = vsub.f32 1.0, %v918
    %v951 = vsub.f32 1.0, %v919
    %v952 = vsub.f32 1.0, %v920
    %v953 = vsub.f32 1.0, %v921
    %v954 = vsub.f32 1.0, %v922
    %v955 = vsub.f32 1.0, %v923
    %v956 = vsub.f32 1.0, %v924
    %v957 = vsub.f32 1.0, %v925
    %v958 = vsub.f32 1.0, %v926
    %v959 = vsub.f32 1.0, %v927
    %v960 = vsub.f32 1.0, %v928
    %v961 = vsub.f32 1.0, %v929
    %v962 = vsub.f32 1.0, %v930
    %v963 = vsub.f32 1.0, %v931
    %v964 = vsub.f32 1.0, %v932
    %v965 = vsub.f32 1.0, %v933
    %vm966 = vcmask 64512
    %v967 = vsel %vm966, %v934, 0.0
    %v968 = vsel %vm966, %v935, 0.0
    %v969 = vadd.f32 %v967, %v968
    %v970 = vrot.slane %v969, 4
    %v971 = vadd.f32 %v969, %v970
    %v972 = vrot.slane %v971, 2
    %v973 = vadd.f32 %v971, %v972
    %v974 = vrot.slane %v973, 1
    %v975 = vadd.f32 %v973, %v974
    %v976 = vsel %vm966, %v936, 0.0
    %v977 = vsel %vm966, %v937, 0.0
    %v978 = vadd.f32 %v976, %v977
    %v979 = vrot.slane %v978, 4
    %v980 = vadd.f32 %v978, %v979
    %v981 = vrot.slane %v980, 2
    %v982 = vadd.f32 %v980, %v981
    %v983 = vrot.slane %v982, 1
    %v984 = vadd.f32 %v982, %v983
    %v985 = vsel %vm966, %v938, 0.0
    %v986 = vsel %vm966, %v939, 0.0
    %v987 = vadd.f32 %v985, %v986
    %v988 = vrot.slane %v987, 4
    %v989 = vadd.f32 %v987, %v988
    %v990 = vrot.slane %v989, 2
    %v991 = vadd.f32 %v989, %v990
    %v992 = vrot.slane %v991, 1
    %v993 = vadd.f32 %v991, %v992
    %v994 = vsel %vm966, %v940, 0.0
    %v995 = vsel %vm966, %v941, 0.0
    %v996 = vadd.f32 %v994, %v995
    %v997 = vrot.slane %v996, 4
    %v998 = vadd.f32 %v996, %v997
    %v999 = vrot.slane %v998, 2
    %v1000 = vadd.f32 %v998, %v999
    %v1001 = vrot.slane %v1000, 1
    %v1002 = vadd.f32 %v1000, %v1001
    %v1003 = vsel %vm966, %v942, 0.0
    %v1004 = vsel %vm966, %v943, 0.0
    %v1005 = vadd.f32 %v1003, %v1004
    %v1006 = vrot.slane %v1005, 4
    %v1007 = vadd.f32 %v1005, %v1006
    %v1008 = vrot.slane %v1007, 2
    %v1009 = vadd.f32 %v1007, %v1008
    %v1010 = vrot.slane %v1009, 1
    %v1011 = vadd.f32 %v1009, %v1010
    %v1012 = vsel %vm966, %v944, 0.0
    %v1013 = vsel %vm966, %v945, 0.0
    %v1014 = vadd.f32 %v1012, %v1013
    %v1015 = vrot.slane %v1014, 4
    %v1016 = vadd.f32 %v1014, %v1015
    %v1017 = vrot.slane %v1016, 2
    %v1018 = vadd.f32 %v1016, %v1017
    %v1019 = vrot.slane %v1018, 1
    %v1020 = vadd.f32 %v1018, %v1019
    %v1021 = vsel %vm966, %v946, 0.0
    %v1022 = vsel %vm966, %v947, 0.0
    %v1023 = vadd.f32 %v1021, %v1022
    %v1024 = vrot.slane %v1023, 4
    %v1025 = vadd.f32 %v1023, %v1024
    %v1026 = vrot.slane %v1025, 2
    %v1027 = vadd.f32 %v1025, %v1026
    %v1028 = vrot.slane %v1027, 1
    %v1029 = vadd.f32 %v1027, %v1028
    %v1030 = vsel %vm966, %v948, 0.0
    %v1031 = vsel %vm966, %v949, 0.0
    %v1032 = vadd.f32 %v1030, %v1031
    %v1033 = vrot.slane %v1032, 4
    %v1034 = vadd.f32 %v1032, %v1033
    %v1035 = vrot.slane %v1034, 2
    %v1036 = vadd.f32 %v1034, %v1035
    %v1037 = vrot.slane %v1036, 1
    %v1038 = vadd.f32 %v1036, %v1037
    %v1039 = vsel %vm966, %v950, 0.0
    %v1040 = vsel %vm966, %v951, 0.0
    %v1041 = vadd.f32 %v1039, %v1040
    %v1042 = vrot.slane %v1041, 4
    %v1043 = vadd.f32 %v1041, %v1042
    %v1044 = vrot.slane %v1043, 2
    %v1045 = vadd.f32 %v1043, %v1044
    %v1046 = vrot.slane %v1045, 1
    %v1047 = vadd.f32 %v1045, %v1046
    %v1048 = vsel %vm966, %v952, 0.0
    %v1049 = vsel %vm966, %v953, 0.0
    %v1050 = vadd.f32 %v1048, %v1049
    %v1051 = vrot.slane %v1050, 4
    %v1052 = vadd.f32 %v1050, %v1051
    %v1053 = vrot.slane %v1052, 2
    %v1054 = vadd.f32 %v1052, %v1053
    %v1055 = vrot.slane %v1054, 1
    %v1056 = vadd.f32 %v1054, %v1055
    %v1057 = vsel %vm966, %v954, 0.0
    %v1058 = vsel %vm966, %v955, 0.0
    %v1059 = vadd.f32 %v1057, %v1058
    %v1060 = vrot.slane %v1059, 4
    %v1061 = vadd.f32 %v1059, %v1060
    %v1062 = vrot.slane %v1061, 2
    %v1063 = vadd.f32 %v1061, %v1062
    %v1064 = vrot.slane %v1063, 1
    %v1065 = vadd.f32 %v1063, %v1064
    %v1066 = vsel %vm966, %v956, 0.0
    %v1067 = vsel %vm966, %v957, 0.0
    %v1068 = vadd.f32 %v1066, %v1067
    %v1069 = vrot.slane %v1068, 4
    %v1070 = vadd.f32 %v1068, %v1069
    %v1071 = vrot.slane %v1070, 2
    %v1072 = vadd.f32 %v1070, %v1071
    %v1073 = vrot.slane %v1072, 1
    %v1074 = vadd.f32 %v1072, %v1073
    %v1075 = vsel %vm966, %v958, 0.0
    %v1076 = vsel %vm966, %v959, 0.0
    %v1077 = vadd.f32 %v1075, %v1076
    %v1078 = vrot.slane %v1077, 4
    %v1079 = vadd.f32 %v1077, %v1078
    %v1080 = vrot.slane %v1079, 2
    %v1081 = vadd.f32 %v1079, %v1080
    %v1082 = vrot.slane %v1081, 1
    %v1083 = vadd.f32 %v1081, %v1082
    %v1084 = vsel %vm966, %v960, 0.0
    %v1085 = vsel %vm966, %v961, 0.0
    %v1086 = vadd.f32 %v1084, %v1085
    %v1087 = vrot.slane %v1086, 4
    %v1088 = vadd.f32 %v1086, %v1087
    %v1089 = vrot.slane %v1088, 2
    %v1090 = vadd.f32 %v1088, %v1089
    %v1091 = vrot.slane %v1090, 1
    %v1092 = vadd.f32 %v1090, %v1091
    %v1093 = vsel %vm966, %v962, 0.0
    %v1094 = vsel %vm966, %v963, 0.0
    %v1095 = vadd.f32 %v1093, %v1094
    %v1096 = vrot.slane %v1095, 4
    %v1097 = vadd.f32 %v1095, %v1096
    %v1098 = vrot.slane %v1097, 2
    %v1099 = vadd.f32 %v1097, %v1098
    %v1100 = vrot.slane %v1099, 1
    %v1101 = vadd.f32 %v1099, %v1100
    %v1102 = vsel %vm966, %v964, 0.0
    %v1103 = vsel %vm966, %v965, 0.0
    %v1104 = vadd.f32 %v1102, %v1103
    %v1105 = vrot.slane %v1104, 4
    %v1106 = vadd.f32 %v1104, %v1105
    %v1107 = vrot.slane %v1106, 2
    %v1108 = vadd.f32 %v1106, %v1107
    %v1109 = vrot.slane %v1108, 1
    %v1110 = vadd.f32 %v1108, %v1109
    %v1111 = vsel %vm966, %v975, 0.0
    %v1112 = vsel %vm966, %v984, 0.0
    %v1113 = vadd.f32 %v1111, %v1112
    %v1114 = vsel %vm966, %v993, 0.0
    %v1115 = vadd.f32 %v1113, %v1114
    %v1116 = vsel %vm966, %v1002, 0.0
    %v1117 = vadd.f32 %v1115, %v1116
    %v1118 = vsel %vm966, %v1011, 0.0
    %v1119 = vadd.f32 %v1117, %v1118
    %v1120 = vsel %vm966, %v1020, 0.0
    %v1121 = vadd.f32 %v1119, %v1120
    %v1122 = vsel %vm966, %v1029, 0.0
    %v1123 = vadd.f32 %v1121, %v1122
    %v1124 = vsel %vm966, %v1038, 0.0
    %v1125 = vadd.f32 %v1123, %v1124
    %v1126 = vsel %vm966, %v1047, 0.0
    %v1127 = vadd.f32 %v1125, %v1126
    %v1128 = vsel %vm966, %v1056, 0.0
    %v1129 = vadd.f32 %v1127, %v1128
    %v1130 = vsel %vm966, %v1065, 0.0
    %v1131 = vadd.f32 %v1129, %v1130
    %v1132 = vsel %vm966, %v1074, 0.0
    %v1133 = vadd.f32 %v1131, %v1132
    %v1134 = vsel %vm966, %v1083, 0.0
    %v1135 = vadd.f32 %v1133, %v1134
    %v1136 = vsel %vm966, %v1092, 0.0
    %v1137 = vadd.f32 %v1135, %v1136
    %v1138 = vsel %vm966, %v1101, 0.0
    %v1139 = vadd.f32 %v1137, %v1138
    %v1140 = vsel %vm966, %v1110, 0.0
    %v1141 = vadd.f32 %v1139, %v1140
    %vm1142 = vcmask 57344
    %1143 = vst.msk [vmem:[#allocation2] sm:$0x1] %vm1142, %v1141
    // Predicated region
    $region6: #{tpu_custom_call.1} parent=1 // pred_check
      _
    $region7: #{tpu_custom_call.1} parent=1 // pred_check_branch
      %1145 = sbr.rel (0) target = $region9
    $region8: #{tpu_custom_call.1} parent=1 // pred_region
      %s1147 = ssub.s32 16, 16
      %1148 = vsyncadd [#allocation3], %s1147
      %s1150 = sshll.u32 [#allocation2], 4
      %s1151 = int_to_ptr.vmem [resolvable:$true] %s1150
      %1153 = dma.vmem_to_hbm [thread:$0]  %s1151, 16, %s1, [#allocation3]
    $region9: #{tpu_custom_call.1} parent=1 // pred_fallthru
      _
    // Predicated region
    $region10: #{tpu_custom_call.1} parent=1 // pred_check
      _
    $region11: #{tpu_custom_call.1} parent=1 // pred_check_branch
      %1155 = sbr.rel (0) target = $region13
    $region12: #{tpu_custom_call.1} parent=1 // pred_region
      %1156 = dma.done [#allocation3], 16
    $region13: #{tpu_custom_call.1} parent=1 // pred_fallthru
      _
    %1157 = vsyncpa [#allocation3], 1

</llo_original>
